<compile_context>
chip_gen: v5e
topology: v5e:2x2
jax: 0.10.0
libtpu: 0.0.40
codegen_flags: <defaults>
</compile_context>

<pallas_src>
import jax
import jax.numpy as jnp
from jax.experimental import pallas as pl
from jax.experimental.pallas import tpu as pltpu

LANE = 128


def _cdiv(a, b):
    return -(-a // b)


def _round_up(x, k):
    return _cdiv(x, k) * k


def _make_qfocal_kernel(tm, steps, n_elem, needs_mask, gamma, alpha):
    """tm / steps / n_elem / needs_mask / gamma / alpha are trace-time constants."""

    def kernel(pred_ref, true_ref, out_ref):
        c = pl.program_id(0)          # core (parallel) axis
        i = pl.program_id(1)          # streaming (arbitrary) axis

        @pl.when(i == 0)
        def _():
            out_ref[...] = jnp.zeros_like(out_ref)

        x = pred_ref[...].astype(jnp.float32)
        t = true_ref[...].astype(jnp.float32)

        # sigmoid computed once, reused for both the BCE log term and |t - p|.
        p = jax.nn.sigmoid(x)

        # BCEWithLogits (reduction='none'), stable form:
        #   max(x,0) - x*t + log1p(exp(-|x|))
        # with log1p(exp(-|x|)) == -log(sigmoid(|x|)) == -log(where(x>=0, p, 1-p))
        log_term = -jnp.log(jnp.where(x >= 0.0, p, 1.0 - p))
        bce = jnp.maximum(x, 0.0) - x * t + log_term

        # alpha_factor = t*alpha + (1-t)*(1-alpha)  ==  t*(2a-1) + (1-a)  (one FMA)
        alpha_factor = t * (2.0 * alpha - 1.0) + (1.0 - alpha)

        d = jnp.abs(t - p)
        if gamma == 1.5:
            mod = d * jnp.sqrt(d)         # d**1.5 without pow (exp+log)
        elif gamma == 2.0:
            mod = d * d
        elif gamma == 1.0:
            mod = d
        else:
            mod = d ** gamma

        loss = bce * alpha_factor * mod

        if needs_mask:
            # Zero out everything past the true element count (partial boundary
            # tiles, re-read clamped tiles, and the zero-padded ragged tail).
            # Out-of-bounds VMEM may hold garbage; where-select drops it even
            # if it is NaN/Inf.  NOTE: int32 flat index => n_elem < 2**31.
            row0 = (c * steps + i) * tm
            rows = row0 + jax.lax.broadcasted_iota(jnp.int32, (tm, LANE), 0)
            lanes = jax.lax.broadcasted_iota(jnp.int32, (tm, LANE), 1)
            flat_idx = rows * LANE + lanes
            loss = jnp.where(flat_idx < n_elem, loss, 0.0)

        # Accumulate into the resident vreg-shaped output block: pure VPU adds,
        # no per-step cross-lane reduce, no scratch buffer / copy-out.
        out_ref[...] += loss.reshape(tm // 8, 8, LANE).sum(axis=0)

    return kernel


def qfocal_loss(pred, true, gamma=1.5, alpha=0.25, reduction="mean",
                tile_rows=2048, n_cores=2):
    """pred, true: same shape (any rank, e.g. NCHW). Returns scalar f32."""
    assert pred.shape == true.shape
    n_elem = pred.size
    assert n_elem > 0
    if reduction not in ("mean", "sum"):
        # TODO(synk): reduction='none' (elementwise output) not implemented; the
        # YOLO QFocalLoss use case wraps BCEWithLogitsLoss(reduction='mean').
        raise NotImplementedError("reduction must be 'mean' or 'sum'")

    # Lane-dense slab: flatten to (m_rows, 128).  Keep at least 8 rows so the
    # (8,128) layout constraint always holds without special cases.
    m_rows = max(_cdiv(n_elem, LANE), 8)

    # Grid = (n_cores_eff, steps).  Balance the row-tile so grid overshoot past
    # m_rows is small (minimal wasted work, good core load balance).
    n_cores_eff = max(1, min(n_cores, _cdiv(m_rows, 8)))
    steps = _cdiv(m_rows, tile_rows * n_cores_eff)
    tm = _round_up(_cdiv(m_rows, n_cores_eff * steps), 8)
    grid_rows = n_cores_eff * steps * tm
    n_tiles = _cdiv(m_rows, tm)               # tiles containing >= 1 valid row
    needs_mask = grid_rows * LANE != n_elem

    pred_flat = pred.reshape(-1)
    true_flat = true.reshape(-1)
    pad = m_rows * LANE - n_elem
    if pad:
        # Only a ragged (<128 elem) tail or tiny inputs hit this small copy;
        # 128-divisible inputs are reshaped for free (no pad, no copy).
        pred_flat = jnp.pad(pred_flat, (0, pad))
        true_flat = jnp.pad(true_flat, (0, pad))
    pred2d = pred_flat.reshape(m_rows, LANE)
    true2d = true_flat.reshape(m_rows, LANE)

    if needs_mask:
        # Clamp the block index so trailing grid cells that would start past the
        # last valid tile just re-read it; their contribution is fully masked.
        def in_map(c, i, _s=steps, _last=n_tiles - 1):
            return (jnp.minimum(c * _s + i, _last), 0)
    else:
        def in_map(c, i, _s=steps):
            return (c * _s + i, 0)

    kernel = _make_qfocal_kernel(tm, steps, n_elem, needs_mask, gamma, alpha)

    partials = pl.pallas_call(
        kernel,
        out_shape=jax.ShapeDtypeStruct((n_cores_eff * 8, LANE), jnp.float32),
        grid_spec=pltpu.PrefetchScalarGridSpec(
            num_scalar_prefetch=0,
            grid=(n_cores_eff, steps),
            in_specs=[
                pl.BlockSpec((tm, LANE), in_map),
                pl.BlockSpec((tm, LANE), in_map),
            ],
            out_specs=pl.BlockSpec((8, LANE), lambda c, i: (c, 0)),
        ),
        compiler_params=pltpu.CompilerParams(
            dimension_semantics=("parallel", "arbitrary"),
        ),
    )(pred2d, true2d)

    total = jnp.sum(partials)                 # tiny final reduce outside kernel
    if reduction == "sum":
        return total
    return total * jnp.float32(1.0 / float(n_elem))   # exact 1/N in double


def qfocal_loss_ref(pred, true, gamma=1.5, alpha=0.25):
    pred = pred.astype(jnp.float32)
    true = true.astype(jnp.float32)
    bce = jnp.maximum(pred, 0.0) - pred * true + jnp.log1p(jnp.exp(-jnp.abs(pred)))
    p = jax.nn.sigmoid(pred)
    alpha_factor = true * alpha + (1.0 - true) * (1.0 - alpha)
    modulating_factor = jnp.abs(true - p) ** gamma
    return jnp.mean(bce * alpha_factor * modulating_factor)


if __name__ == "__main__":
    key = jax.random.PRNGKey(0)

    test_shapes = [
        (2, 4, 16, 16),    # grid-aligned path (no mask, no pad)
        (1, 1, 72, 128),   # 128-divisible but partial boundary tile (mask, no pad)
        (3, 5, 7, 11),     # ragged tail (<128): small zero-pad + mask path
    ]

    ok = True
    for shape in test_shapes:
        key, k1, k2 = jax.random.split(key, 3)
        pred = jax.random.normal(k1, shape, dtype=jnp.float32)
        true = (jax.random.uniform(k2, shape) > 0.5).astype(jnp.float32)

        out = jax.block_until_ready(qfocal_loss(pred, true))
        ref = qfocal_loss_ref(pred, true)
        if not jnp.allclose(out, ref, rtol=1e-5, atol=1e-5):
            ok = False
            print("MISMATCH", shape, float(out), float(ref))

    if ok:
        print("KERNEL_OK")
</pallas_src>

<mosaic_0001>
module attributes {stable_mosaic.version = 11 : i64} {
  func.func @kernel(%arg0: i32, %arg1: i32, %arg2: memref<8x128xf32, #tpu.memory_space<vmem>>, %arg3: memref<8x128xf32, #tpu.memory_space<vmem>>, %arg4: memref<8x128xf32, #tpu.memory_space<vmem>>) attributes {dimension_semantics = [#tpu.dimension_semantics<parallel>, #tpu.dimension_semantics<arbitrary>], iteration_bounds = array<i64: 2, 1>, scalar_prefetch = 0 : i64, scratch_operands = 0 : i64, tpu.core_type = #tpu.core_type<tc>, window_params = [{transform_indices = @transform_0, window_bounds = array<i64: 8, 128>}, {transform_indices = @transform_1, window_bounds = array<i64: 8, 128>}, {transform_indices = @transform_2, window_bounds = array<i64: 8, 128>}]} {
    %c0_i32 = arith.constant 0 : i32
    %0 = arith.cmpi eq, %arg1, %c0_i32 : i32
    %1 = arith.extui %0 : i1 to i32
    %c0_i32_0 = arith.constant 0 : i32
    %2 = arith.cmpi ne, %1, %c0_i32_0 : i32
    scf.if %2 {
      %cst_15 = arith.constant 0.000000e+00 : f32
      %38 = vector.broadcast %cst_15 : f32 to vector<8x128xf32>
      %c0_16 = arith.constant 0 : index
      %c0_17 = arith.constant 0 : index
      %39 = vector.load %arg4[%c0_16, %c0_17] : memref<8x128xf32, #tpu.memory_space<vmem>>, vector<8x128xf32>
      tpu.vector_store %arg4[%c0_16, %c0_17], %38 {strides = array<i32>} : memref<8x128xf32, #tpu.memory_space<vmem>>, vector<8x128xf32>,
    } else {
    }
    %c0 = arith.constant 0 : index
    %c0_1 = arith.constant 0 : index
    %3 = vector.load %arg2[%c0, %c0_1] : memref<8x128xf32, #tpu.memory_space<vmem>>, vector<8x128xf32>
    %c0_2 = arith.constant 0 : index
    %c0_3 = arith.constant 0 : index
    %4 = vector.load %arg3[%c0_2, %c0_3] : memref<8x128xf32, #tpu.memory_space<vmem>>, vector<8x128xf32>
    %5 = arith.negf %3 : vector<8x128xf32>
    %6 = math.exp %5 : vector<8x128xf32>
    %cst = arith.constant 1.000000e+00 : f32
    %7 = vector.broadcast %cst : f32 to vector<8x128xf32>
    %8 = arith.addf %7, %6 : vector<8x128xf32>
    %9 = arith.divf %7, %8 : vector<8x128xf32>
    %cst_4 = arith.constant 0.000000e+00 : f32
    %10 = vector.broadcast %cst_4 : f32 to vector<8x128xf32>
    %11 = arith.cmpf oge, %3, %10 : vector<8x128xf32>
    %cst_5 = arith.constant 1.000000e+00 : f32
    %12 = vector.broadcast %cst_5 : f32 to vector<8x128xf32>
    %13 = arith.subf %12, %9 : vector<8x128xf32>
    %14 = arith.select %11, %9, %13 : vector<8x128xi1>, vector<8x128xf32>
    %15 = math.log %14 : vector<8x128xf32>
    %cst_6 = arith.constant 0.000000e+00 : f32
    %16 = vector.broadcast %cst_6 : f32 to vector<8x128xf32>
    %17 = arith.subf %16, %15 : vector<8x128xf32>
    %cst_7 = arith.constant 0.000000e+00 : f32
    %18 = vector.broadcast %cst_7 : f32 to vector<8x128xf32>
    %19 = arith.maximumf %3, %18 : vector<8x128xf32>
    %20 = arith.mulf %3, %4 : vector<8x128xf32>
    %21 = arith.subf %19, %20 : vector<8x128xf32>
    %22 = arith.addf %21, %17 : vector<8x128xf32>
    %cst_8 = arith.constant -5.000000e-01 : f32
    %23 = vector.broadcast %cst_8 : f32 to vector<8x128xf32>
    %24 = arith.mulf %4, %23 : vector<8x128xf32>
    %cst_9 = arith.constant 7.500000e-01 : f32
    %25 = vector.broadcast %cst_9 : f32 to vector<8x128xf32>
    %26 = arith.addf %24, %25 : vector<8x128xf32>
    %27 = arith.subf %4, %9 : vector<8x128xf32>
    %28 = math.absf %27 : vector<8x128xf32>
    %29 = math.sqrt %28 : vector<8x128xf32>
    %30 = arith.mulf %28, %29 : vector<8x128xf32>
    %31 = arith.mulf %22, %26 : vector<8x128xf32>
    %32 = arith.mulf %31, %30 : vector<8x128xf32>
    %c0_10 = arith.constant 0 : index
    %c0_11 = arith.constant 0 : index
    %33 = vector.load %arg4[%c0_10, %c0_11] : memref<8x128xf32, #tpu.memory_space<vmem>>, vector<8x128xf32>
    %34 = vector.shape_cast %32 : vector<8x128xf32> to vector<1x8x128xf32>
    %cst_12 = arith.constant dense<0.000000e+00> : vector<8x128xf32>
    %35 = vector.multi_reduction <add>, %34, %cst_12 [0] : vector<1x8x128xf32> to vector<8x128xf32>
    %36 = arith.addf %33, %35 : vector<8x128xf32>
    %c0_13 = arith.constant 0 : index
    %c0_14 = arith.constant 0 : index
    %37 = vector.load %arg4[%c0_13, %c0_14] : memref<8x128xf32, #tpu.memory_space<vmem>>, vector<8x128xf32>
    tpu.vector_store %arg4[%c0_13, %c0_14], %36 {strides = array<i32>} : memref<8x128xf32, #tpu.memory_space<vmem>>, vector<8x128xf32>,
    return
  }
  func.func @transform_0(%arg0: i32, %arg1: i32) -> (i32, i32) {
    %c1_i32 = arith.constant 1 : i32
    %0 = arith.muli %arg0, %c1_i32 : i32
    %1 = arith.addi %0, %arg1 : i32
    %c0_i32 = arith.constant 0 : i32
    %c0_i32_0 = arith.constant 0 : i32
    return %1, %c0_i32 : i32, i32
  }
  func.func @transform_1(%arg0: i32, %arg1: i32) -> (i32, i32) {
    %c1_i32 = arith.constant 1 : i32
    %0 = arith.muli %arg0, %c1_i32 : i32
    %1 = arith.addi %0, %arg1 : i32
    %c0_i32 = arith.constant 0 : i32
    %c0_i32_0 = arith.constant 0 : i32
    return %1, %c0_i32 : i32, i32
  }
  func.func @transform_2(%arg0: i32, %arg1: i32) -> (i32, i32) {
    %c0_i32 = arith.constant 0 : i32
    %c0_i32_0 = arith.constant 0 : i32
    return %arg0, %c0_i32 : i32, i32
  }
}

</mosaic_0001>

<llo_original>
// kernel: tpu_custom_call.1
$region0: #{tpu_custom_call.1}
  #allocation0 [shape = 'u32[]', space=smem, size = 0x4, offset = 0x4, fixed_abs, tag = 'smem constant byte address 0x4 - core index']
  #allocation1 [shape = 'u32[72,128]{1,0:T(1,128)}', space=vmem, size = 0x9000, scoped, tag = 'internal scratch']
  %s0 = inlined_call_operand.hbm [shape: f32[16,128], index: 0, kind: input, shape index: {}]
  %s1 = inlined_call_operand.hbm [shape: f32[16,128], index: 1, kind: input, shape index: {}]
  %s2 = inlined_call_operand.hbm [shape: f32[16,128], index: 2, kind: output, shape index: {}]
  %s3 = sld [smem:[#allocation0]]
  $region53: #{tpu_custom_call.1} parent=0
    _
  %s5 = ssub.s32 1, %s3
  %s6 = scalar_select 0, %s5, %s3
  $region1: #{tpu_custom_call.1} parent=0
    #allocation2 [shape = 'u8[8192]{0}', space=vmem, size = 0x2000, scoped, tag = 'input window, operand 0']
    #allocation3 [shape = 's32[2]{0}', space=sflag, size = 0x8, scoped, tag = 'scoped memory for tpu_custom_call.1']
    #allocation4 [shape = 's32[2]{0}', space=sflag, size = 0x8, scoped, tag = 'scoped memory for tpu_custom_call.1']
    #allocation5 [shape = 'u8[8192]{0}', space=vmem, size = 0x2000, scoped, tag = 'input window, operand 1']
    #allocation6 [shape = 's32[2]{0}', space=sflag, size = 0x8, scoped, tag = 'scoped memory for tpu_custom_call.1']
    #allocation7 [shape = 'u8[8192]{0}', space=vmem, size = 0x2000, scoped, tag = 'output window, operand 0']
    %7 = vsyncpa [#allocation3], 0
    %s8 = scalar_lea.sflag [#allocation3], 1
    %9 = vsyncpa %s8, 0
    %10 = vsyncpa [#allocation6], 0
    %s11 = scalar_lea.sflag [#allocation6], 1
    %12 = vsyncpa %s11, 0
    %13 = vsyncpa [#allocation4], 0
    %s14 = scalar_lea.sflag [#allocation4], 1
    %15 = vsyncpa %s14, 0
    loop: start=0, step=1, limit=4
    $region2: #{tpu_custom_call.1} parent=1 // loop_pre_header
      _
    $region3: #{tpu_custom_call.1} parent=1 // loop_header
      %s17 = sphi 0, %s21
      %p18 = scmp.ge.s32.totalorder %s17, 4
      %s24 = sphi 0, %s36
      %s25 = sphi 0, %s32
      %s26 = sphi 0, %s24
      %s27 = sphi 0, %s25
      %s28 = sphi 0, %s26
      %s29 = sphi 0, %s27
      %s41 = sphi 0, %s43
      %s44 = sphi 0, %s41
      %s45 = sphi 0, %s44
      %s61 = sphi 0, %s45
      %s69 = sphi 0, %s71
      %s72 = sphi 0, %s69
      %s73 = sphi 0, %s72
      %s89 = sphi 0, %s73
      %s95 = sphi 0, %s97
      %s98 = sphi 0, %s95
      %s99 = sphi 0, %s98
      %s115 = sphi 0, %s99
    $region4: #{tpu_custom_call.1} parent=1 // loop_header_branch
      %20 = sbr.rel (%p18) target = $region8
    $region5: #{tpu_custom_call.1} parent=1 // loop_body
      %s22 = ssub.s32 %s17, 1
      %s23 = ssub.s32 %s17, 2
      %s30 = sadd.s32 1, %s25
      %p31 = scmp.ge.s32.totalorder %s30, 1
      %s32 = scalar_select %p31, 0, %s30
      %s33 = sadd.s32 1, %s24
      %s34 = scalar_select %p31, %s33, %s24
      %p35 = scmp.ge.s32.totalorder %s34, 2
      %s36 = scalar_select %p35, 0, %s34
      %s37 = sadd.s32 %s24, %s25
      %s38 = sadd.s32 %s36, %s32
      %s39 = ssub.s32 %s37, %s38
      %p40 = scmp.eq.s32.totalorder %s39, 0
      %s42 = sadd.s32 %s41, 1
      %s43 = scalar_select %p40, %s41, %s42
      %p46 = pneg %p40
      %p47 = scmp.eq.s32.totalorder %s17, 1
      %p48 = por %p46, %p47
      %p49 = scmp.ne.s32.totalorder %s41, %s44
      %p50 = scmp.eq.s32.totalorder %s17, 0
      %p51 = por %p49, %p50
      %p52 = scmp.ne.s32.totalorder %s41, %s44
      %p53 = scmp.eq.s32.totalorder %s22, 1
      %p54 = por %p52, %p53
      %p55 = scmp.ne.s32.totalorder %s44, %s45
      %p56 = scmp.eq.s32.totalorder %s22, 0
      %p57 = por %p55, %p56
      %p58 = scmp.ne.s32.totalorder %s44, %s45
      %p59 = scmp.eq.s32.totalorder %s23, 1
      %p60 = por %p58, %p59
      %p62 = scmp.ne.s32.totalorder %s45, %s61
      %p63 = scmp.eq.s32.totalorder %s23, 0
      %p64 = por %p62, %p63
      %s65 = sadd.s32 %s24, %s25
      %s66 = sadd.s32 %s36, %s32
      %s67 = ssub.s32 %s65, %s66
      %p68 = scmp.eq.s32.totalorder %s67, 0
      %s70 = sadd.s32 %s69, 1
      %s71 = scalar_select %p68, %s69, %s70
      %p74 = pneg %p68
      %p75 = scmp.eq.s32.totalorder %s17, 1
      %p76 = por %p74, %p75
      %p77 = scmp.ne.s32.totalorder %s69, %s72
      %p78 = scmp.eq.s32.totalorder %s17, 0
      %p79 = por %p77, %p78
      %p80 = scmp.ne.s32.totalorder %s69, %s72
      %p81 = scmp.eq.s32.totalorder %s22, 1
      %p82 = por %p80, %p81
      %p83 = scmp.ne.s32.totalorder %s72, %s73
      %p84 = scmp.eq.s32.totalorder %s22, 0
      %p85 = por %p83, %p84
      %p86 = scmp.ne.s32.totalorder %s72, %s73
      %p87 = scmp.eq.s32.totalorder %s23, 1
      %p88 = por %p86, %p87
      %p90 = scmp.ne.s32.totalorder %s73, %s89
      %p91 = scmp.eq.s32.totalorder %s23, 0
      %p92 = por %p90, %p91
      %s93 = ssub.s32 %s24, %s36
      %p94 = scmp.eq.s32.totalorder %s93, 0
      %s96 = sadd.s32 %s95, 1
      %s97 = scalar_select %p94, %s95, %s96
      %p100 = pneg %p94
      %p101 = scmp.eq.s32.totalorder %s17, 1
      %p102 = por %p100, %p101
      %p103 = scmp.ne.s32.totalorder %s95, %s98
      %p104 = scmp.eq.s32.totalorder %s17, 0
      %p105 = por %p103, %p104
      %p106 = scmp.ne.s32.totalorder %s95, %s98
      %p107 = scmp.eq.s32.totalorder %s22, 1
      %p108 = por %p106, %p107
      %p109 = scmp.ne.s32.totalorder %s98, %s99
      %p110 = scmp.eq.s32.totalorder %s22, 0
      %p111 = por %p109, %p110
      %p112 = scmp.ne.s32.totalorder %s98, %s99
      %p113 = scmp.eq.s32.totalorder %s23, 1
      %p114 = por %p112, %p113
      %p116 = scmp.ne.s32.totalorder %s99, %s115
      %p117 = scmp.eq.s32.totalorder %s23, 0
      %p118 = por %p116, %p117
      %p119 = scmp.le.s32.totalorder 1, %s17
      %p120 = scmp.lt.s32.totalorder %s17, 3
      %p121 = pnand %p119, %p120
      %p122 = pneg %p121
      // Predicated region
      $region9: #{tpu_custom_call.1} parent=5 // pred_check
        _
      $region10: #{tpu_custom_call.1} parent=5 // pred_check_branch
        %124 = sbr.rel (%p121) target = $region12
      $region11: #{tpu_custom_call.1} parent=5 // pred_region
        %s125 = ssub.s32 %s17, 1
      $region12: #{tpu_custom_call.1} parent=5 // pred_fallthru
        _
      %p126 = scmp.lt.s32.totalorder %s17, 2
      // Predicated region
      $region13: #{tpu_custom_call.1} parent=5 // pred_check
        %p127 = pneg %p126
      $region14: #{tpu_custom_call.1} parent=5 // pred_check_branch
        %129 = sbr.rel (%p127) target = $region16
      $region15: #{tpu_custom_call.1} parent=5 // pred_region
        // Predicated region
        $region17: #{tpu_custom_call.1} parent=15 // pred_check
          %p130 = pneg %p51
        $region18: #{tpu_custom_call.1} parent=15 // pred_check_branch
          %132 = sbr.rel (%p130) target = $region20
        $region19: #{tpu_custom_call.1} parent=15 // pred_region
          %s133 = sand.u32 %s41, 1
          %s134 = scalar_lea.sflag [#allocation3], %s133
          %s135 = sand.u32 %s41, 1
          %s136 = smul.addr %s135, 8
          %s137 = scalar_lea.vmem [#allocation2], %s136
          %s138 = sadd.s32 %s24, %s25
          %140 = vsyncadd %s134, 0
          %s141 = smul.addr %s138, 8
          %s142 = scalar_lea.hbm %s0, %s141
          %s144 = sshll.u32 %s142, 4
          %s145 = int_to_ptr.hbm [resolvable:$true] %s144
          %s146 = sshll.u32 %s137, 4
          %s147 = int_to_ptr.vmem [resolvable:$true] %s146
          %149 = dma.hbm_to_vmem [thread:$0]  %s145, 128, %s147, %s134
        $region20: #{tpu_custom_call.1} parent=15 // pred_fallthru
          _
        // Predicated region
        $region21: #{tpu_custom_call.1} parent=15 // pred_check
          %p150 = pneg %p79
        $region22: #{tpu_custom_call.1} parent=15 // pred_check_branch
          %152 = sbr.rel (%p150) target = $region24
        $region23: #{tpu_custom_call.1} parent=15 // pred_region
          %s153 = sand.u32 %s69, 1
          %s154 = scalar_lea.sflag [#allocation6], %s153
          %s155 = sand.u32 %s69, 1
          %s156 = smul.addr %s155, 8
          %s157 = scalar_lea.vmem [#allocation5], %s156
          %s158 = sadd.s32 %s24, %s25
          %160 = vsyncadd %s154, 0
          %s161 = smul.addr %s158, 8
          %s162 = scalar_lea.hbm %s1, %s161
          %s164 = sshll.u32 %s162, 4
          %s165 = int_to_ptr.hbm [resolvable:$true] %s164
          %s166 = sshll.u32 %s157, 4
          %s167 = int_to_ptr.vmem [resolvable:$true] %s166
          %169 = dma.hbm_to_vmem [thread:$0]  %s165, 128, %s167, %s154
        $region24: #{tpu_custom_call.1} parent=15 // pred_fallthru
          _
      $region16: #{tpu_custom_call.1} parent=5 // pred_fallthru
        _
      %p170 = scmp.le.s32.totalorder 1, %s17
      %p171 = scmp.lt.s32.totalorder %s17, 3
      %p172 = pnand %p170, %p171
      %p173 = pneg %p172
      // Predicated region
      $region25: #{tpu_custom_call.1} parent=5 // pred_check
        _
      $region26: #{tpu_custom_call.1} parent=5 // pred_check_branch
        %175 = sbr.rel (%p172) target = $region28
      $region27: #{tpu_custom_call.1} parent=5 // pred_region
        %s176 = ssub.s32 %s17, 1
        %s177 = sand.u32 %s44, 1
        %s178 = scalar_lea.sflag [#allocation3], %s177
        %s179 = sand.u32 %s44, 1
        %s180 = smul.addr %s179, 8
        %s181 = scalar_lea.vmem [#allocation2], %s180
        // Predicated region
        $region29: #{tpu_custom_call.1} parent=27 // pred_check
          %p182 = pneg %p57
        $region30: #{tpu_custom_call.1} parent=27 // pred_check_branch
          %184 = sbr.rel (%p182) target = $region32
        $region31: #{tpu_custom_call.1} parent=27 // pred_region
          %186 = dma.done %s178, 128
        $region32: #{tpu_custom_call.1} parent=27 // pred_fallthru
          _
        %s187 = sand.u32 %s72, 1
        %s188 = scalar_lea.sflag [#allocation6], %s187
        %s189 = sand.u32 %s72, 1
        %s190 = smul.addr %s189, 8
        %s191 = scalar_lea.vmem [#allocation5], %s190
        // Predicated region
        $region33: #{tpu_custom_call.1} parent=27 // pred_check
          %p192 = pneg %p85
        $region34: #{tpu_custom_call.1} parent=27 // pred_check_branch
          %194 = sbr.rel (%p192) target = $region36
        $region35: #{tpu_custom_call.1} parent=27 // pred_region
          %196 = dma.done %s188, 128
        $region36: #{tpu_custom_call.1} parent=27 // pred_fallthru
          _
        %s197 = sand.u32 %s44, 1
        %s198 = scalar_lea.sflag [#allocation3], %s197
        %s199 = sand.u32 %s44, 1
        %s200 = smul.addr %s199, 8
        %s201 = scalar_lea.vmem [#allocation2], %s200
        %p202 = pneg %p57
        %p203 = pneg %p54
        %s204 = sand.u32 %s72, 1
        %s205 = scalar_lea.sflag [#allocation6], %s204
        %s206 = sand.u32 %s72, 1
        %s207 = smul.addr %s206, 8
        %s208 = scalar_lea.vmem [#allocation5], %s207
        %p209 = pneg %p85
        %p210 = pneg %p82
        %p211 = pneg %p111
        %p212 = pneg %p108
        %s213 = sand.u32 %s98, 1
        %s214 = scalar_lea.sflag [#allocation4], %s213
        %s215 = sand.u32 %s98, 1
        %s216 = smul.addr %s215, 8
        %s217 = scalar_lea.vmem [#allocation7], %s216
        %s218 = sadd.s32 %s26, %s27
        %s219 = sadd.s32 %s26, %s27
        %p220 = scmp.eq.s32.totalorder %s27, 0
        // Predicated region
        $region37: #{tpu_custom_call.1} parent=27 // pred_check
          %p221 = pneg %p220
        $region38: #{tpu_custom_call.1} parent=27 // pred_check_branch
          %223 = sbr.rel (%p221) target = $region40
        $region39: #{tpu_custom_call.1} parent=27 // pred_region
          %224 = vst [vmem:[%s217] sm:$0xff] 0.0
        $region40: #{tpu_custom_call.1} parent=27 // pred_fallthru
          _
        %v225 = vld [vmem:[%s181] sm:$0xff]
        %v226 = vld [vmem:[%s191] sm:$0xff]
        %v227 = vxor.u32 %v225, 2147483648
        %v228 = vmul.f32 %v227, 1.442695
        %v229 = vpow.pop %v228
        %v230 = vadd.f32 %v229, 1.0
        %v231 = vrcp.pop %v230
        %v232 = vmul.f32 %v230, %v231
        %v233 = vsub.f32 1.0, %v232
        %v234 = vmul.f32 %v231, %v233
        %v235 = vadd.f32 %v231, %v234
        %vm236 = vweird.f32 %v230
        %vm237 = vweird.f32 %v231
        %vm238 = vmor %vm236, %vm237
        %v239 = vsel %vm238, %v231, %v235
        %v240 = vand.u32 2147483647, %v230
        %vm241 = vcmp.eq.f32.partialorder %v240, 8.507059e+37
        %v242 = vand.u32 %v230, 2147483648
        %v243 = vor.u32 1.1754944e-38, %v242
        %v244 = vsel %vm241, %v243, %v239
        %v245 = vmul.f32 1.0, %v244
        %vm246 = vcmp.ge.f32.partialorder %v225, 0.0
        %v247 = vsub.f32 1.0, %v245
        %v248 = vsel %vm246, %v245, %v247
        %v249 = vlog2.pop %v248
        %v250 = vmul.f32 %v249, 0.6931472
        %v251 = vsub.f32 0.0, %v250
        %v252 = vmax.f32 %v225, 0.0
        %v253 = vmul.f32 %v225, %v226
        %v254 = vsub.f32 %v252, %v253
        %v255 = vadd.f32 %v254, %v251
        %v256 = vmul.f32 %v226, -0.5
        %v257 = vadd.f32 %v256, 0.75
        %v258 = vsub.f32 %v226, %v245
        %v259 = vand.u32 2147483647, %v258
        %v260 = vrsqrt.pop %v259
        %v261 = vmul.f32 %v260, %v259
        %v262 = vmul.f32 %v261, %v260
        %v263 = vmul.f32 0.5, %v262
        %v264 = vsub.f32 1.5, %v263
        %v265 = vmul.f32 %v260, %v264
        %v266 = vmul.f32 %v259, %v265
        %vm267 = vcmp.eq.f32.partialorder %v259, inf
        %v268 = vsel %vm267, %v259, %v266
        %vm269 = vcmp.eq.f32.partialorder %v259, 0.0
        %v270 = vand.u32 %v259, 2147483648
        %v271 = vsel %vm269, %v270, %v268
        %v272 = vmul.f32 %v259, %v271
        %v273 = vmul.f32 %v255, %v257
        %v274 = vmul.f32 %v273, %v272
        %v275 = vld [vmem:[%s217] sm:$0xff]
        %v276 = vadd.f32 %v274, 0.0
        %v277 = vadd.f32 %v275, %v276
        %278 = vst [vmem:[%s217] sm:$0xff] %v277
        %s279 = sand.u32 %s98, 1
        %s280 = scalar_lea.sflag [#allocation4], %s279
        %s281 = sand.u32 %s98, 1
        %s282 = smul.addr %s281, 8
        %s283 = scalar_lea.vmem [#allocation7], %s282
        // Predicated region
        $region41: #{tpu_custom_call.1} parent=27 // pred_check
          %p284 = pneg %p108
        $region42: #{tpu_custom_call.1} parent=27 // pred_check_branch
          %286 = sbr.rel (%p284) target = $region44
        $region43: #{tpu_custom_call.1} parent=27 // pred_region
          %288 = vsyncadd %s280, 0
          %s289 = smul.addr %s26, 8
          %s290 = scalar_lea.hbm %s2, %s289
          %s292 = sshll.u32 %s283, 4
          %s293 = int_to_ptr.vmem [resolvable:$true] %s292
          %s294 = sshll.u32 %s290, 4
          %s295 = int_to_ptr.hbm [resolvable:$true] %s294
          %297 = dma.vmem_to_hbm [thread:$0]  %s293, 128, %s295, %s280
        $region44: #{tpu_custom_call.1} parent=27 // pred_fallthru
          _
      $region28: #{tpu_custom_call.1} parent=5 // pred_fallthru
        _
      %p298 = scmp.le.s32.totalorder 2, %s17
      // Predicated region
      $region45: #{tpu_custom_call.1} parent=5 // pred_check
        %p299 = pneg %p298
      $region46: #{tpu_custom_call.1} parent=5 // pred_check_branch
        %301 = sbr.rel (%p299) target = $region48
      $region47: #{tpu_custom_call.1} parent=5 // pred_region
        %s302 = ssub.s32 %s17, 2
        // Predicated region
        $region49: #{tpu_custom_call.1} parent=47 // pred_check
          %p303 = pneg %p114
        $region50: #{tpu_custom_call.1} parent=47 // pred_check_branch
          %305 = sbr.rel (%p303) target = $region52
        $region51: #{tpu_custom_call.1} parent=47 // pred_region
          %s306 = sand.u32 %s99, 1
          %s307 = scalar_lea.sflag [#allocation4], %s306
          %s308 = sand.u32 %s99, 1
          %s309 = smul.addr %s308, 8
          %s310 = scalar_lea.vmem [#allocation7], %s309
          %312 = dma.done %s307, 128
        $region52: #{tpu_custom_call.1} parent=47 // pred_fallthru
          _
      $region48: #{tpu_custom_call.1} parent=5 // pred_fallthru
        _
    $region6: #{tpu_custom_call.1} parent=1 // loop_footer
      %s21 = sadd.s32 1, %s17
    $region7: #{tpu_custom_call.1} parent=1 // loop_footer_branch
      %16 = sbr.rel target = $region3
    $region8: #{tpu_custom_call.1} parent=1 // loop_exit
      _
    %313 = vsyncpa [#allocation3], 1
    %s314 = scalar_lea.sflag [#allocation3], 1
    %315 = vsyncpa %s314, 1
    %316 = vsyncpa [#allocation6], 1
    %s317 = scalar_lea.sflag [#allocation6], 1
    %318 = vsyncpa %s317, 1
    %319 = vsyncpa [#allocation4], 1
    %s320 = scalar_lea.sflag [#allocation4], 1
    %321 = vsyncpa %s320, 1

</llo_original>
